<compile_context>
chip_gen: v5e
topology: v5e:2x2
jax: 0.10.0
libtpu: 0.0.40
codegen_flags: <defaults>
</compile_context>

<pallas_src>
import jax
import jax.numpy as jnp
from jax.experimental import pallas as pl
from jax.experimental.pallas import tpu as pltpu

NEG_SLOPE = 0.2
JPAD = 128           # lane-aligned per-component group width (>= num_joints)
EPS = 1e-12          # F.normalize eps


# ---------------------------- fused kernel ----------------------------------
def _generator_kernel(z_ref, w1_ref, b1_ref, w2_ref, b2_ref, w3_ref, b3_ref,
                      out_ref):
    # --- MLP (MXU in bf16, f32 accumulate) ---
    z = z_ref[...].astype(jnp.bfloat16)
    h = jnp.dot(z, w1_ref[...], preferred_element_type=jnp.float32) + b1_ref[...]
    h = jnp.maximum(h, NEG_SLOPE * h)                       # leaky_relu(0.2)
    # nn.Dropout(p=0.1) is the identity at inference time.
    # TODO(synk): training-mode dropout would need pltpu.prng_random_bits masking.
    h = jnp.dot(h.astype(jnp.bfloat16), w2_ref[...],
                preferred_element_type=jnp.float32) + b2_ref[...]
    h = jnp.maximum(h, NEG_SLOPE * h)                       # leaky_relu(0.2)
    x6 = jnp.dot(h.astype(jnp.bfloat16), w3_ref[...],
                 preferred_element_type=jnp.float32) + b3_ref[...]
    # x6: (tm, 6*JPAD), component-major groups [a1x a1y a1z a2x a2y a2z],
    # joints in the first `num_joints` lanes of each 128-lane group (rest zero).

    # --- Gram-Schmidt epilogue (f32, VPU), aligned (tm, 128) lane slices ---
    a1x = x6[:, 0 * JPAD:1 * JPAD]
    a1y = x6[:, 1 * JPAD:2 * JPAD]
    a1z = x6[:, 2 * JPAD:3 * JPAD]
    a2x = x6[:, 3 * JPAD:4 * JPAD]
    a2y = x6[:, 4 * JPAD:5 * JPAD]
    a2z = x6[:, 5 * JPAD:6 * JPAD]

    inv1 = 1.0 / jnp.maximum(jnp.sqrt(a1x * a1x + a1y * a1y + a1z * a1z), EPS)
    b1x = a1x * inv1
    b1y = a1y * inv1
    b1z = a1z * inv1                                         # b1 = normalize(a1)

    d = b1x * a2x + b1y * a2y + b1z * a2z
    u2x = a2x - d * b1x
    u2y = a2y - d * b1y
    u2z = a2z - d * b1z
    inv2 = 1.0 / jnp.maximum(jnp.sqrt(u2x * u2x + u2y * u2y + u2z * u2z), EPS)
    b2x = u2x * inv2
    b2y = u2y * inv2
    b2z = u2z * inv2                                         # b2 = normalize(a2 - <b1,a2>b1)

    b3x = b1y * b2z - b1z * b2y                              # b3 = cross(b1, b2)
    b3y = b1z * b2x - b1x * b2z
    b3z = b1x * b2y - b1y * b2x

    # Row-major 3x3 with columns [b1,b2,b3]: order = b1x b2x b3x b1y b2y b3y b1z b2z b3z.
    out_ref[:, 0 * JPAD:1 * JPAD] = b1x
    out_ref[:, 1 * JPAD:2 * JPAD] = b2x
    out_ref[:, 2 * JPAD:3 * JPAD] = b3x
    out_ref[:, 3 * JPAD:4 * JPAD] = b1y
    out_ref[:, 4 * JPAD:5 * JPAD] = b2y
    out_ref[:, 5 * JPAD:6 * JPAD] = b3y
    out_ref[:, 6 * JPAD:7 * JPAD] = b1z
    out_ref[:, 7 * JPAD:8 * JPAD] = b2z
    out_ref[:, 8 * JPAD:9 * JPAD] = b3z


# ------------------- host-side packing of the out-linear ---------------------
def _round_up(x, m):
    return ((x + m - 1) // m) * m


def _pack_out_params(w3, b3, num_joints):
    """Permute + zero-pad the out-linear columns to component-major, 128-lane groups.

    Torch layout: column j*6 + 2*i     = a1 component i of joint j
                  column j*6 + 2*i + 1 = a2 component i of joint j
    Packed layout: group c (width 128) holds component c for all joints, where
                  c in [a1x, a1y, a1z, a2x, a2y, a2z].
    """
    j = jnp.arange(num_joints)
    pad = JPAD - num_joints
    gw, gb = [], []
    for c in range(6):
        if c < 3:
            src = j * 6 + 2 * c                # a1, row c
        else:
            src = j * 6 + 2 * (c - 3) + 1      # a2, row c-3
        gw.append(jnp.pad(w3[:, src], ((0, 0), (0, pad))))
        gb.append(jnp.pad(b3[:, src], ((0, 0), (0, pad))))
    return jnp.concatenate(gw, axis=1), jnp.concatenate(gb, axis=1)


# --------------------------------- wrapper -----------------------------------
def generator_forward(z, params, num_joints=21, tm=None):
    """Generator.forward(Zin, output_type='matrot') -> (B, num_joints, 9)."""
    # TODO(synk): output_type='aa' branch (matrot2aa) not implemented.
    w1, b1, w2, b2, w3, b3 = params
    B, latentD = z.shape
    H = w1.shape[1]
    assert w3.shape[1] == num_joints * 6 and num_joints <= JPAD

    # In a real deployment the packing / bf16 casts would be done once at load time.
    w3p, b3p = _pack_out_params(w3, b3, num_joints)

    if tm is None:
        tm = min(256, _round_up(B, 8))         # v7x: pick tm ~= Bpad/2 to use both TCs
    Bpad = _round_up(B, tm)
    z_pad = jnp.pad(z, ((0, Bpad - B), (0, 0))) if Bpad != B else z

    out = pl.pallas_call(
        _generator_kernel,
        out_shape=jax.ShapeDtypeStruct((Bpad, 9 * JPAD), jnp.float32),
        grid_spec=pltpu.PrefetchScalarGridSpec(
            num_scalar_prefetch=0,
            grid=(Bpad // tm,),
            in_specs=[
                pl.BlockSpec((tm, latentD), lambda i: (i, 0)),     # Zin tile
                pl.BlockSpec((latentD, H), lambda i: (0, 0)),      # fc1 W (bf16)
                pl.BlockSpec((1, H), lambda i: (0, 0)),            # fc1 b (f32)
                pl.BlockSpec((H, H), lambda i: (0, 0)),            # fc2 W (bf16)
                pl.BlockSpec((1, H), lambda i: (0, 0)),            # fc2 b (f32)
                pl.BlockSpec((H, 6 * JPAD), lambda i: (0, 0)),     # out W packed (bf16)
                pl.BlockSpec((1, 6 * JPAD), lambda i: (0, 0)),     # out b packed (f32)
            ],
            out_specs=pl.BlockSpec((tm, 9 * JPAD), lambda i: (i, 0)),
        ),
        compiler_params=pltpu.CompilerParams(
            dimension_semantics=("parallel",)),
    )(z_pad,
      w1.astype(jnp.bfloat16), b1.astype(jnp.float32),
      w2.astype(jnp.bfloat16), b2.astype(jnp.float32),
      w3p.astype(jnp.bfloat16), b3p.astype(jnp.float32))

    # Tiny final re-layout: (B, 9, JPAD) -> drop joint padding -> (B, J, 9).
    r = out[:B].reshape(B, 9, JPAD)[:, :, :num_joints]
    return jnp.transpose(r, (0, 2, 1)).reshape(B, num_joints, 9)


# ------------------------- pure-JAX reference (check) ------------------------
def generator_ref(z, params, num_joints=21):
    """Mirrors the kernel's compute path (bf16 matmuls, f32 epilogue) but uses the
    original torch-layout math: reshape(-1,3,2), normalize, cross, stack."""
    w1, b1, w2, b2, w3, b3 = params
    bf = jnp.bfloat16
    h = jnp.dot(z.astype(bf), w1.astype(bf),
                preferred_element_type=jnp.float32) + b1
    h = jnp.maximum(h, NEG_SLOPE * h)
    h = jnp.dot(h.astype(bf), w2.astype(bf),
                preferred_element_type=jnp.float32) + b2
    h = jnp.maximum(h, NEG_SLOPE * h)
    x6 = jnp.dot(h.astype(bf), w3.astype(bf),
                 preferred_element_type=jnp.float32) + b3
    r = x6.reshape(-1, 3, 2)
    a1, a2 = r[:, :, 0], r[:, :, 1]
    b1v = a1 / jnp.maximum(jnp.linalg.norm(a1, axis=1, keepdims=True), EPS)
    dot = jnp.sum(b1v * a2, axis=1, keepdims=True)
    u2 = a2 - dot * b1v
    b2v = u2 / jnp.maximum(jnp.linalg.norm(u2, axis=1, keepdims=True), EPS)
    b3v = jnp.cross(b1v, b2v)
    R = jnp.stack([b1v, b2v, b3v], axis=-1)     # (N, 3, 3), columns = b1,b2,b3
    return R.reshape(z.shape[0], num_joints, 9)


if __name__ == "__main__":
    # Small shapes consistent with the module: batch=16, latentD=32,
    # num_neurons=128 (scaled-down from 512), num_joints=21 -> out dim 126.
    B, latentD, H, J = 16, 32, 128, 21
    key = jax.random.PRNGKey(0)
    ks = jax.random.split(key, 7)
    z = jax.random.normal(ks[0], (B, latentD), jnp.float32)
    w1 = jax.random.normal(ks[1], (latentD, H), jnp.float32) / jnp.sqrt(latentD)
    b1 = jax.random.normal(ks[2], (1, H), jnp.float32) * 0.01
    w2 = jax.random.normal(ks[3], (H, H), jnp.float32) / jnp.sqrt(H)
    b2 = jax.random.normal(ks[4], (1, H), jnp.float32) * 0.01
    w3 = jax.random.normal(ks[5], (H, J * 6), jnp.float32) / jnp.sqrt(H)
    b3 = jax.random.normal(ks[6], (1, J * 6), jnp.float32) * 0.01
    params = (w1, b1, w2, b2, w3, b3)

    out = generator_forward(z, params, num_joints=J)
    out = jax.block_until_ready(out)
    assert out.shape == (B, J, 9)

    # Match the bf16-matmul reference (same numerics, independent code path).
    ref = generator_ref(z, params, num_joints=J)
    err = float(jnp.max(jnp.abs(out - ref)))
    assert err < 1e-3, f"max abs error vs reference: {err}"

    # Validity check independent of matmul precision: columns orthonormal.
    R = out.reshape(B * J, 3, 3)
    gram = jnp.einsum('nij,nik->njk', R, R)
    ortho_err = float(jnp.max(jnp.abs(gram - jnp.eye(3))))
    assert ortho_err < 1e-3, f"orthonormality error: {ortho_err}"

    print("KERNEL_OK")
</pallas_src>

<mosaic_0001>
module attributes {stable_mosaic.version = 11 : i64} {
  func.func @_generator_kernel(%arg0: i32, %arg1: memref<16x32xf32, #tpu.memory_space<vmem>>, %arg2: memref<32x128xbf16, #tpu.memory_space<vmem>>, %arg3: memref<1x128xf32, #tpu.memory_space<vmem>>, %arg4: memref<128x128xbf16, #tpu.memory_space<vmem>>, %arg5: memref<1x128xf32, #tpu.memory_space<vmem>>, %arg6: memref<128x768xbf16, #tpu.memory_space<vmem>>, %arg7: memref<1x768xf32, #tpu.memory_space<vmem>>, %arg8: memref<16x1152xf32, #tpu.memory_space<vmem>>) attributes {dimension_semantics = [#tpu.dimension_semantics<parallel>], iteration_bounds = array<i64: 1>, scalar_prefetch = 0 : i64, scratch_operands = 0 : i64, tpu.core_type = #tpu.core_type<tc>, window_params = [{transform_indices = @transform_0, window_bounds = array<i64: 16, 32>}, {pipeline_mode = #tpu.pipeline_mode<synchronous>, transform_indices = @transform_1, window_bounds = array<i64: 32, 128>}, {pipeline_mode = #tpu.pipeline_mode<synchronous>, transform_indices = @transform_2, window_bounds = array<i64: 1, 128>}, {pipeline_mode = #tpu.pipeline_mode<synchronous>, transform_indices = @transform_3, window_bounds = array<i64: 128, 128>}, {pipeline_mode = #tpu.pipeline_mode<synchronous>, transform_indices = @transform_4, window_bounds = array<i64: 1, 128>}, {pipeline_mode = #tpu.pipeline_mode<synchronous>, transform_indices = @transform_5, window_bounds = array<i64: 128, 768>}, {pipeline_mode = #tpu.pipeline_mode<synchronous>, transform_indices = @transform_6, window_bounds = array<i64: 1, 768>}, {transform_indices = @transform_7, window_bounds = array<i64: 16, 1152>}]} {
    %c0 = arith.constant 0 : index
    %c0_0 = arith.constant 0 : index
    %0 = vector.load %arg1[%c0, %c0_0] : memref<16x32xf32, #tpu.memory_space<vmem>>, vector<16x32xf32>
    %1 = arith.truncf %0 : vector<16x32xf32> to vector<16x32xbf16>
    %c0_1 = arith.constant 0 : index
    %c0_2 = arith.constant 0 : index
    %2 = vector.load %arg2[%c0_1, %c0_2] : memref<32x128xbf16, #tpu.memory_space<vmem>>, vector<32x128xbf16>
    %cst = arith.constant dense<0.000000e+00> : vector<16x128xf32>
    %3 = tpu.matmul %1, %2, %cst {dimension_numbers = #tpu.dot_dimension_numbers<[1], [0], [0], [1], [0, 0, 1, 1], [], []>} : vector<16x32xbf16>, vector<32x128xbf16>, vector<16x128xf32> -> vector<16x128xf32>
    %c0_3 = arith.constant 0 : index
    %c0_4 = arith.constant 0 : index
    %4 = vector.load %arg3[%c0_3, %c0_4] : memref<1x128xf32, #tpu.memory_space<vmem>>, vector<1x128xf32>
    %5 = vector.broadcast %4 : vector<1x128xf32> to vector<16x128xf32>
    %6 = arith.addf %3, %5 : vector<16x128xf32>
    %cst_5 = arith.constant 2.000000e-01 : f32
    %7 = vector.broadcast %cst_5 : f32 to vector<16x128xf32>
    %8 = arith.mulf %7, %6 : vector<16x128xf32>
    %9 = arith.maximumf %6, %8 : vector<16x128xf32>
    %10 = arith.truncf %9 : vector<16x128xf32> to vector<16x128xbf16>
    %c0_6 = arith.constant 0 : index
    %c0_7 = arith.constant 0 : index
    %11 = vector.load %arg4[%c0_6, %c0_7] : memref<128x128xbf16, #tpu.memory_space<vmem>>, vector<128x128xbf16>
    %cst_8 = arith.constant dense<0.000000e+00> : vector<16x128xf32>
    %12 = tpu.matmul %10, %11, %cst_8 {dimension_numbers = #tpu.dot_dimension_numbers<[1], [0], [0], [1], [0, 0, 1, 1], [], []>} : vector<16x128xbf16>, vector<128x128xbf16>, vector<16x128xf32> -> vector<16x128xf32>
    %c0_9 = arith.constant 0 : index
    %c0_10 = arith.constant 0 : index
    %13 = vector.load %arg5[%c0_9, %c0_10] : memref<1x128xf32, #tpu.memory_space<vmem>>, vector<1x128xf32>
    %14 = vector.broadcast %13 : vector<1x128xf32> to vector<16x128xf32>
    %15 = arith.addf %12, %14 : vector<16x128xf32>
    %cst_11 = arith.constant 2.000000e-01 : f32
    %16 = vector.broadcast %cst_11 : f32 to vector<16x128xf32>
    %17 = arith.mulf %16, %15 : vector<16x128xf32>
    %18 = arith.maximumf %15, %17 : vector<16x128xf32>
    %19 = arith.truncf %18 : vector<16x128xf32> to vector<16x128xbf16>
    %c0_12 = arith.constant 0 : index
    %c0_13 = arith.constant 0 : index
    %20 = vector.load %arg6[%c0_12, %c0_13] : memref<128x768xbf16, #tpu.memory_space<vmem>>, vector<128x768xbf16>
    %cst_14 = arith.constant dense<0.000000e+00> : vector<16x768xf32>
    %21 = tpu.matmul %19, %20, %cst_14 {dimension_numbers = #tpu.dot_dimension_numbers<[1], [0], [0], [1], [0, 0, 1, 1], [], []>} : vector<16x128xbf16>, vector<128x768xbf16>, vector<16x768xf32> -> vector<16x768xf32>
    %c0_15 = arith.constant 0 : index
    %c0_16 = arith.constant 0 : index
    %22 = vector.load %arg7[%c0_15, %c0_16] : memref<1x768xf32, #tpu.memory_space<vmem>>, vector<1x768xf32>
    %23 = vector.broadcast %22 : vector<1x768xf32> to vector<16x768xf32>
    %24 = arith.addf %21, %23 : vector<16x768xf32>
    %25 = vector.extract_strided_slice %24 {offsets = [0, 0], sizes = [16, 128], strides = [1, 1]} : vector<16x768xf32> to vector<16x128xf32>
    %26 = vector.extract_strided_slice %24 {offsets = [0, 128], sizes = [16, 128], strides = [1, 1]} : vector<16x768xf32> to vector<16x128xf32>
    %27 = vector.extract_strided_slice %24 {offsets = [0, 256], sizes = [16, 128], strides = [1, 1]} : vector<16x768xf32> to vector<16x128xf32>
    %28 = vector.extract_strided_slice %24 {offsets = [0, 384], sizes = [16, 128], strides = [1, 1]} : vector<16x768xf32> to vector<16x128xf32>
    %29 = vector.extract_strided_slice %24 {offsets = [0, 512], sizes = [16, 128], strides = [1, 1]} : vector<16x768xf32> to vector<16x128xf32>
    %30 = vector.extract_strided_slice %24 {offsets = [0, 640], sizes = [16, 128], strides = [1, 1]} : vector<16x768xf32> to vector<16x128xf32>
    %31 = arith.mulf %25, %25 : vector<16x128xf32>
    %32 = arith.mulf %26, %26 : vector<16x128xf32>
    %33 = arith.addf %31, %32 : vector<16x128xf32>
    %34 = arith.mulf %27, %27 : vector<16x128xf32>
    %35 = arith.addf %33, %34 : vector<16x128xf32>
    %36 = math.sqrt %35 : vector<16x128xf32>
    %cst_17 = arith.constant 9.99999996E-13 : f32
    %37 = vector.broadcast %cst_17 : f32 to vector<16x128xf32>
    %38 = arith.maximumf %36, %37 : vector<16x128xf32>
    %cst_18 = arith.constant 1.000000e+00 : f32
    %39 = vector.broadcast %cst_18 : f32 to vector<16x128xf32>
    %40 = arith.divf %39, %38 : vector<16x128xf32>
    %41 = arith.mulf %25, %40 : vector<16x128xf32>
    %42 = arith.mulf %26, %40 : vector<16x128xf32>
    %43 = arith.mulf %27, %40 : vector<16x128xf32>
    %44 = arith.mulf %41, %28 : vector<16x128xf32>
    %45 = arith.mulf %42, %29 : vector<16x128xf32>
    %46 = arith.addf %44, %45 : vector<16x128xf32>
    %47 = arith.mulf %43, %30 : vector<16x128xf32>
    %48 = arith.addf %46, %47 : vector<16x128xf32>
    %49 = arith.mulf %48, %41 : vector<16x128xf32>
    %50 = arith.subf %28, %49 : vector<16x128xf32>
    %51 = arith.mulf %48, %42 : vector<16x128xf32>
    %52 = arith.subf %29, %51 : vector<16x128xf32>
    %53 = arith.mulf %48, %43 : vector<16x128xf32>
    %54 = arith.subf %30, %53 : vector<16x128xf32>
    %55 = arith.mulf %50, %50 : vector<16x128xf32>
    %56 = arith.mulf %52, %52 : vector<16x128xf32>
    %57 = arith.addf %55, %56 : vector<16x128xf32>
    %58 = arith.mulf %54, %54 : vector<16x128xf32>
    %59 = arith.addf %57, %58 : vector<16x128xf32>
    %60 = math.sqrt %59 : vector<16x128xf32>
    %cst_19 = arith.constant 9.99999996E-13 : f32
    %61 = vector.broadcast %cst_19 : f32 to vector<16x128xf32>
    %62 = arith.maximumf %60, %61 : vector<16x128xf32>
    %cst_20 = arith.constant 1.000000e+00 : f32
    %63 = vector.broadcast %cst_20 : f32 to vector<16x128xf32>
    %64 = arith.divf %63, %62 : vector<16x128xf32>
    %65 = arith.mulf %50, %64 : vector<16x128xf32>
    %66 = arith.mulf %52, %64 : vector<16x128xf32>
    %67 = arith.mulf %54, %64 : vector<16x128xf32>
    %68 = arith.mulf %42, %67 : vector<16x128xf32>
    %69 = arith.mulf %43, %66 : vector<16x128xf32>
    %70 = arith.subf %68, %69 : vector<16x128xf32>
    %71 = arith.mulf %43, %65 : vector<16x128xf32>
    %72 = arith.mulf %41, %67 : vector<16x128xf32>
    %73 = arith.subf %71, %72 : vector<16x128xf32>
    %74 = arith.mulf %41, %66 : vector<16x128xf32>
    %75 = arith.mulf %42, %65 : vector<16x128xf32>
    %76 = arith.subf %74, %75 : vector<16x128xf32>
    %c0_21 = arith.constant 0 : index
    %c0_22 = arith.constant 0 : index
    %77 = vector.load %arg8[%c0_21, %c0_22] : memref<16x1152xf32, #tpu.memory_space<vmem>>, vector<16x128xf32>
    tpu.vector_store %arg8[%c0_21, %c0_22], %41 {strides = array<i32>} : memref<16x1152xf32, #tpu.memory_space<vmem>>, vector<16x128xf32>,
    %c0_23 = arith.constant 0 : index
    %c128 = arith.constant 128 : index
    %78 = vector.load %arg8[%c0_23, %c128] : memref<16x1152xf32, #tpu.memory_space<vmem>>, vector<16x128xf32>
    tpu.vector_store %arg8[%c0_23, %c128], %65 {strides = array<i32>} : memref<16x1152xf32, #tpu.memory_space<vmem>>, vector<16x128xf32>,
    %c0_24 = arith.constant 0 : index
    %c256 = arith.constant 256 : index
    %79 = vector.load %arg8[%c0_24, %c256] : memref<16x1152xf32, #tpu.memory_space<vmem>>, vector<16x128xf32>
    tpu.vector_store %arg8[%c0_24, %c256], %70 {strides = array<i32>} : memref<16x1152xf32, #tpu.memory_space<vmem>>, vector<16x128xf32>,
    %c0_25 = arith.constant 0 : index
    %c384 = arith.constant 384 : index
    %80 = vector.load %arg8[%c0_25, %c384] : memref<16x1152xf32, #tpu.memory_space<vmem>>, vector<16x128xf32>
    tpu.vector_store %arg8[%c0_25, %c384], %42 {strides = array<i32>} : memref<16x1152xf32, #tpu.memory_space<vmem>>, vector<16x128xf32>,
    %c0_26 = arith.constant 0 : index
    %c512 = arith.constant 512 : index
    %81 = vector.load %arg8[%c0_26, %c512] : memref<16x1152xf32, #tpu.memory_space<vmem>>, vector<16x128xf32>
    tpu.vector_store %arg8[%c0_26, %c512], %66 {strides = array<i32>} : memref<16x1152xf32, #tpu.memory_space<vmem>>, vector<16x128xf32>,
    %c0_27 = arith.constant 0 : index
    %c640 = arith.constant 640 : index
    %82 = vector.load %arg8[%c0_27, %c640] : memref<16x1152xf32, #tpu.memory_space<vmem>>, vector<16x128xf32>
    tpu.vector_store %arg8[%c0_27, %c640], %73 {strides = array<i32>} : memref<16x1152xf32, #tpu.memory_space<vmem>>, vector<16x128xf32>,
    %c0_28 = arith.constant 0 : index
    %c768 = arith.constant 768 : index
    %83 = vector.load %arg8[%c0_28, %c768] : memref<16x1152xf32, #tpu.memory_space<vmem>>, vector<16x128xf32>
    tpu.vector_store %arg8[%c0_28, %c768], %43 {strides = array<i32>} : memref<16x1152xf32, #tpu.memory_space<vmem>>, vector<16x128xf32>,
    %c0_29 = arith.constant 0 : index
    %c896 = arith.constant 896 : index
    %84 = vector.load %arg8[%c0_29, %c896] : memref<16x1152xf32, #tpu.memory_space<vmem>>, vector<16x128xf32>
    tpu.vector_store %arg8[%c0_29, %c896], %67 {strides = array<i32>} : memref<16x1152xf32, #tpu.memory_space<vmem>>, vector<16x128xf32>,
    %c0_30 = arith.constant 0 : index
    %c1024 = arith.constant 1024 : index
    %85 = vector.load %arg8[%c0_30, %c1024] : memref<16x1152xf32, #tpu.memory_space<vmem>>, vector<16x128xf32>
    tpu.vector_store %arg8[%c0_30, %c1024], %76 {strides = array<i32>} : memref<16x1152xf32, #tpu.memory_space<vmem>>, vector<16x128xf32>,
    return
  }
  func.func @transform_0(%arg0: i32) -> (i32, i32) {
    %c0_i32 = arith.constant 0 : i32
    %c0_i32_0 = arith.constant 0 : i32
    return %arg0, %c0_i32 : i32, i32
  }
  func.func @transform_1(%arg0: i32) -> (i32, i32) {
    %c0_i32 = arith.constant 0 : i32
    %c0_i32_0 = arith.constant 0 : i32
    %c0_i32_1 = arith.constant 0 : i32
    return %c0_i32, %c0_i32_0 : i32, i32
  }
  func.func @transform_2(%arg0: i32) -> (i32, i32) {
    %c0_i32 = arith.constant 0 : i32
    %c0_i32_0 = arith.constant 0 : i32
    %c0_i32_1 = arith.constant 0 : i32
    return %c0_i32, %c0_i32_0 : i32, i32
  }
  func.func @transform_3(%arg0: i32) -> (i32, i32) {
    %c0_i32 = arith.constant 0 : i32
    %c0_i32_0 = arith.constant 0 : i32
    %c0_i32_1 = arith.constant 0 : i32
    return %c0_i32, %c0_i32_0 : i32, i32
  }
  func.func @transform_4(%arg0: i32) -> (i32, i32) {
    %c0_i32 = arith.constant 0 : i32
    %c0_i32_0 = arith.constant 0 : i32
    %c0_i32_1 = arith.constant 0 : i32
    return %c0_i32, %c0_i32_0 : i32, i32
  }
  func.func @transform_5(%arg0: i32) -> (i32, i32) {
    %c0_i32 = arith.constant 0 : i32
    %c0_i32_0 = arith.constant 0 : i32
    %c0_i32_1 = arith.constant 0 : i32
    return %c0_i32, %c0_i32_0 : i32, i32
  }
  func.func @transform_6(%arg0: i32) -> (i32, i32) {
    %c0_i32 = arith.constant 0 : i32
    %c0_i32_0 = arith.constant 0 : i32
    %c0_i32_1 = arith.constant 0 : i32
    return %c0_i32, %c0_i32_0 : i32, i32
  }
  func.func @transform_7(%arg0: i32) -> (i32, i32) {
    %c0_i32 = arith.constant 0 : i32
    %c0_i32_0 = arith.constant 0 : i32
    return %arg0, %c0_i32 : i32, i32
  }
}

</mosaic_0001>

<llo_original>
// kernel: tpu_custom_call.1
$region0: #{tpu_custom_call.1}
  #allocation0 [shape = 'u32[]', space=smem, size = 0x4, offset = 0x4, fixed_abs, tag = 'smem constant byte address 0x4 - core index']
  #allocation1 [shape = 'u32[72,128]{1,0:T(1,128)}', space=vmem, size = 0x9000, scoped, tag = 'internal scratch']
  %s0 = inlined_call_operand.hbm [shape: f32[16,32], index: 0, kind: input, shape index: {}]
  %s1 = inlined_call_operand.hbm [shape: bf16[32,128], index: 1, kind: input, shape index: {}]
  %s2 = inlined_call_operand.vmem [shape: f32[1,128], index: 2, kind: input, shape index: {}]
  %s3 = inlined_call_operand.hbm [shape: bf16[128,128], index: 3, kind: input, shape index: {}]
  %s4 = inlined_call_operand.vmem [shape: f32[1,128], index: 4, kind: input, shape index: {}]
  %s5 = inlined_call_operand.hbm [shape: bf16[128,768], index: 5, kind: input, shape index: {}]
  %s6 = inlined_call_operand.hbm [shape: f32[1,768], index: 6, kind: input, shape index: {}]
  %s7 = inlined_call_operand.hbm [shape: f32[16,1152], index: 7, kind: output, shape index: {}]
  %s8 = sld [smem:[#allocation0]]
  $region58: #{tpu_custom_call.1} parent=0
    _
  %s10 = ssub.s32 1, %s8
  %s11 = scalar_select 0, %s10, %s8
  $region1: #{tpu_custom_call.1} parent=0
    #allocation2 [shape = 'u8[8192]{0}', space=vmem, size = 0x2000, scoped, tag = 'input window, operand 0, single buffered']
    #allocation3 [shape = 's32[1]{0}', space=sflag, size = 0x4, scoped, tag = 'scoped memory for tpu_custom_call.1']
    #allocation4 [shape = 's32[1]{0}', space=sflag, size = 0x4, scoped, tag = 'scoped memory for tpu_custom_call.1']
    #allocation5 [shape = 'u8[8192]{0}', space=vmem, size = 0x2000, scoped, tag = 'input window, operand 1, single buffered']
    #allocation6 [shape = 's32[1]{0}', space=sflag, size = 0x4, scoped, tag = 'scoped memory for tpu_custom_call.1']
    #allocation7 [shape = 'u8[32768]{0}', space=vmem, size = 0x8000, scoped, tag = 'input window, operand 3, single buffered']
    #allocation8 [shape = 'u8[196608]{0}', space=vmem, size = 0x30000, scoped, tag = 'input window, operand 5, single buffered']
    #allocation9 [shape = 's32[1]{0}', space=sflag, size = 0x4, scoped, tag = 'scoped memory for tpu_custom_call.1']
    #allocation10 [shape = 'u8[3072]{0}', space=vmem, size = 0xc00, scoped, tag = 'input window, operand 6, single buffered']
    #allocation11 [shape = 'u8[73728]{0}', space=vmem, size = 0x12000, scoped, tag = 'output window, operand 0, single buffered']
    %12 = vsyncpa [#allocation3], 0
    %13 = vsyncpa [#allocation6], 0
    %14 = vsyncpa [#allocation9], 0
    %15 = vsyncpa [#allocation4], 0
    // Predicated region
    $region2: #{tpu_custom_call.1} parent=1 // pred_check
      _
    $region3: #{tpu_custom_call.1} parent=1 // pred_check_branch
      %17 = sbr.rel (0) target = $region5
    $region4: #{tpu_custom_call.1} parent=1 // pred_region
      %19 = vsyncadd [#allocation3], 0
      %s20 = sshll.u32 %s0, 4
      %s21 = int_to_ptr.hbm [resolvable:$true] %s20
      %s22 = sshll.u32 [#allocation2], 4
      %s23 = int_to_ptr.vmem [resolvable:$true] %s22
      %28 = dma.hbm_to_vmem [thread:$0]  %s21, 256, %s23, [#allocation3], 128, 128, 8
    $region5: #{tpu_custom_call.1} parent=1 // pred_fallthru
      _
    // Predicated region
    $region6: #{tpu_custom_call.1} parent=1 // pred_check
      _
    $region7: #{tpu_custom_call.1} parent=1 // pred_check_branch
      %30 = sbr.rel (0) target = $region9
    $region8: #{tpu_custom_call.1} parent=1 // pred_region
      %32 = vsyncadd [#allocation6], 0
      %s33 = sshll.u32 %s1, 4
      %s34 = int_to_ptr.hbm [resolvable:$true] %s33
      %s35 = sshll.u32 [#allocation5], 4
      %s36 = int_to_ptr.vmem [resolvable:$true] %s35
      %41 = dma.hbm_to_vmem [thread:$0]  %s34, 256, %s36, [#allocation6], 64, 64, 4
    $region9: #{tpu_custom_call.1} parent=1 // pred_fallthru
      _
    // Predicated region
    $region10: #{tpu_custom_call.1} parent=1 // pred_check
      _
    $region11: #{tpu_custom_call.1} parent=1 // pred_check_branch
      %43 = sbr.rel (0) target = $region13
    $region12: #{tpu_custom_call.1} parent=1 // pred_region
      _
    $region13: #{tpu_custom_call.1} parent=1 // pred_fallthru
      _
    // Predicated region
    $region14: #{tpu_custom_call.1} parent=1 // pred_check
      _
    $region15: #{tpu_custom_call.1} parent=1 // pred_check_branch
      %45 = sbr.rel (0) target = $region17
    $region16: #{tpu_custom_call.1} parent=1 // pred_region
      %47 = vsyncadd [#allocation6], 0
      %s48 = sshll.u32 %s3, 4
      %s49 = int_to_ptr.hbm [resolvable:$true] %s48
      %s50 = sshll.u32 [#allocation7], 4
      %s51 = int_to_ptr.vmem [resolvable:$true] %s50
      %56 = dma.hbm_to_vmem [thread:$0]  %s49, 1024, %s51, [#allocation6], 64, 64, 4
    $region17: #{tpu_custom_call.1} parent=1 // pred_fallthru
      _
    // Predicated region
    $region18: #{tpu_custom_call.1} parent=1 // pred_check
      _
    $region19: #{tpu_custom_call.1} parent=1 // pred_check_branch
      %58 = sbr.rel (0) target = $region21
    $region20: #{tpu_custom_call.1} parent=1 // pred_region
      _
    $region21: #{tpu_custom_call.1} parent=1 // pred_fallthru
      _
    // Predicated region
    $region22: #{tpu_custom_call.1} parent=1 // pred_check
      _
    $region23: #{tpu_custom_call.1} parent=1 // pred_check_branch
      %60 = sbr.rel (0) target = $region25
    $region24: #{tpu_custom_call.1} parent=1 // pred_region
      %62 = vsyncadd [#allocation9], 0
      %s63 = sshll.u32 %s5, 4
      %s64 = int_to_ptr.hbm [resolvable:$true] %s63
      %s65 = sshll.u32 [#allocation8], 4
      %s66 = int_to_ptr.vmem [resolvable:$true] %s65
      %71 = dma.hbm_to_vmem [thread:$0]  %s64, 6144, %s66, [#allocation9], 384, 384, 24
    $region25: #{tpu_custom_call.1} parent=1 // pred_fallthru
      _
    // Predicated region
    $region26: #{tpu_custom_call.1} parent=1 // pred_check
      _
    $region27: #{tpu_custom_call.1} parent=1 // pred_check_branch
      %73 = sbr.rel (0) target = $region29
    $region28: #{tpu_custom_call.1} parent=1 // pred_region
      %75 = vsyncadd [#allocation9], 0
      %s77 = sshll.u32 %s6, 4
      %s78 = int_to_ptr.hbm [resolvable:$true] %s77
      %s79 = sshll.u32 [#allocation10], 4
      %s80 = int_to_ptr.vmem [resolvable:$true] %s79
      %82 = dma.hbm_to_vmem [thread:$0]  %s78, 96, %s80, [#allocation9]
    $region29: #{tpu_custom_call.1} parent=1 // pred_fallthru
      _
    // Predicated region
    $region30: #{tpu_custom_call.1} parent=1 // pred_check
      _
    $region31: #{tpu_custom_call.1} parent=1 // pred_check_branch
      %84 = sbr.rel (0) target = $region33
    $region32: #{tpu_custom_call.1} parent=1 // pred_region
      %86 = dma.done [#allocation3], 256
    $region33: #{tpu_custom_call.1} parent=1 // pred_fallthru
      _
    // Predicated region
    $region34: #{tpu_custom_call.1} parent=1 // pred_check
      _
    $region35: #{tpu_custom_call.1} parent=1 // pred_check_branch
      %88 = sbr.rel (0) target = $region37
    $region36: #{tpu_custom_call.1} parent=1 // pred_region
      %90 = dma.done [#allocation6], 256
    $region37: #{tpu_custom_call.1} parent=1 // pred_fallthru
      _
    // Predicated region
    $region38: #{tpu_custom_call.1} parent=1 // pred_check
      _
    $region39: #{tpu_custom_call.1} parent=1 // pred_check_branch
      %92 = sbr.rel (0) target = $region41
    $region40: #{tpu_custom_call.1} parent=1 // pred_region
      %94 = dma.done [#allocation6], 1024
    $region41: #{tpu_custom_call.1} parent=1 // pred_fallthru
      _
    // Predicated region
    $region42: #{tpu_custom_call.1} parent=1 // pred_check
      _
    $region43: #{tpu_custom_call.1} parent=1 // pred_check_branch
      %96 = sbr.rel (0) target = $region45
    $region44: #{tpu_custom_call.1} parent=1 // pred_region
      %98 = dma.done [#allocation9], 6144
    $region45: #{tpu_custom_call.1} parent=1 // pred_fallthru
      _
    // Predicated region
    $region46: #{tpu_custom_call.1} parent=1 // pred_check
      _
    $region47: #{tpu_custom_call.1} parent=1 // pred_check_branch
      %100 = sbr.rel (0) target = $region49
    $region48: #{tpu_custom_call.1} parent=1 // pred_region
      %102 = dma.done [#allocation9], 96
    $region49: #{tpu_custom_call.1} parent=1 // pred_fallthru
      _
    %v104 = vld [vmem:[#allocation2] sm:$0xff]
    %v105 = vld [vmem:[#allocation2 + $0x8] sm:$0xff]
    %v106 = vpack.c.bf16 %v105, %v104
    %v107 = vld [vmem:[#allocation5] sm:$0xf]
    %v108 = vld [vmem:[#allocation5 + $0x4] sm:$0xf]
    %v109 = vld [vmem:[#allocation5 + $0x8] sm:$0xf]
    %v110 = vld [vmem:[#allocation5 + $0xc] sm:$0xf]
    %v111 = vld [vmem:[%s2] sm:$0x1]
    %v113 = vperm.slane %v111, 0
    %v119 = vunpack.c.l.b16 %v107
    %v120 = vunpack.c.l.b16 %v108
    %v121 = vunpack.c.l.b16 %v109
    %v122 = vunpack.c.l.b16 %v110
    %v123 = vpack.c.b16 %v120, %v119
    %v124 = vpack.c.b16 %v122, %v121
    %vm127 = vcmask 261120
    %v129 = vsel %vm127, %v106, 0
    %131 = vmatpush.bf16.msra.mxu0 0
    %132 = vmatpush.bf16.msra.mxu0 0
    %133 = vmatpush.bf16.msra.mxu0 0
    %134 = vmatpush.bf16.msra.mxu0 0
    %135 = vmatpush.bf16.msra.mxu0 0
    %136 = vmatpush.bf16.msra.mxu0 0
    %137 = vmatpush.bf16.msra.mxu0 %v124
    %138 = vmatpush.bf16.msra.mxu0 %v123
    %139 = vmatmul.bf16.gmra.mxu0 %v129
    %v140 = vpop.f32.mrf.mxu0
    %v141 = vadd.f32 %v113, %v140
    %v142 = vpop.f32.mrf.mxu0
    %v143 = vadd.f32 %v113, %v142
    %144 = vdwg.mxu0
    %v145 = vmul.f32 %v141, 0.2
    %v146 = vmul.f32 %v143, 0.2
    %v147 = vmax.f32 %v141, %v145
    %v148 = vmax.f32 %v143, %v146
    %v149 = vpack.c.bf16 %v148, %v147
    %v150 = vld [vmem:[#allocation7] sm:$0xf]
    %v151 = vld [vmem:[#allocation7 + $0x4] sm:$0xf]
    %v152 = vld [vmem:[#allocation7 + $0x8] sm:$0xf]
    %v153 = vld [vmem:[#allocation7 + $0xc] sm:$0xf]
    %v154 = vld [vmem:[#allocation7 + $0x10] sm:$0xf]
    %v155 = vld [vmem:[#allocation7 + $0x14] sm:$0xf]
    %v156 = vld [vmem:[#allocation7 + $0x18] sm:$0xf]
    %v157 = vld [vmem:[#allocation7 + $0x1c] sm:$0xf]
    %v158 = vld [vmem:[#allocation7 + $0x20] sm:$0xf]
    %v159 = vld [vmem:[#allocation7 + $0x24] sm:$0xf]
    %v160 = vld [vmem:[#allocation7 + $0x28] sm:$0xf]
    %v161 = vld [vmem:[#allocation7 + $0x2c] sm:$0xf]
    %v162 = vld [vmem:[#allocation7 + $0x30] sm:$0xf]
    %v163 = vld [vmem:[#allocation7 + $0x34] sm:$0xf]
    %v164 = vld [vmem:[#allocation7 + $0x38] sm:$0xf]
    %v165 = vld [vmem:[#allocation7 + $0x3c] sm:$0xf]
    %v166 = vld [vmem:[%s4] sm:$0x1]
    %v168 = vperm.slane %v166, 0
    %v186 = vunpack.c.l.b16 %v150
    %v187 = vunpack.c.l.b16 %v151
    %v188 = vunpack.c.l.b16 %v152
    %v189 = vunpack.c.l.b16 %v153
    %v190 = vunpack.c.l.b16 %v154
    %v191 = vunpack.c.l.b16 %v155
    %v192 = vunpack.c.l.b16 %v156
    %v193 = vunpack.c.l.b16 %v157
    %v194 = vunpack.c.l.b16 %v158
    %v195 = vunpack.c.l.b16 %v159
    %v196 = vunpack.c.l.b16 %v160
    %v197 = vunpack.c.l.b16 %v161
    %v198 = vunpack.c.l.b16 %v162
    %v199 = vunpack.c.l.b16 %v163
    %v200 = vunpack.c.l.b16 %v164
    %v201 = vunpack.c.l.b16 %v165
    %v202 = vpack.c.b16 %v187, %v186
    %v203 = vpack.c.b16 %v189, %v188
    %v204 = vpack.c.b16 %v191, %v190
    %v205 = vpack.c.b16 %v193, %v192
    %v206 = vpack.c.b16 %v195, %v194
    %v207 = vpack.c.b16 %v197, %v196
    %v208 = vpack.c.b16 %v199, %v198
    %v209 = vpack.c.b16 %v201, %v200
    %218 = vmatpush.bf16.msra.mxu0 %v209
    %219 = vmatpush.bf16.msra.mxu0 %v208
    %220 = vmatpush.bf16.msra.mxu0 %v207
    %221 = vmatpush.bf16.msra.mxu0 %v206
    %222 = vmatpush.bf16.msra.mxu0 %v205
    %223 = vmatpush.bf16.msra.mxu0 %v204
    %224 = vmatpush.bf16.msra.mxu0 %v203
    %225 = vmatpush.bf16.msra.mxu0 %v202
    %226 = vmatmul.bf16.gmra.mxu0 %v149
    %v227 = vpop.f32.mrf.mxu0
    %v228 = vadd.f32 %v168, %v227
    %v229 = vpop.f32.mrf.mxu0
    %v230 = vadd.f32 %v168, %v229
    %231 = vdwg.mxu0
    %v232 = vmul.f32 %v228, 0.2
    %v233 = vmul.f32 %v230, 0.2
    %v234 = vmax.f32 %v228, %v232
    %v235 = vmax.f32 %v230, %v233
    %v236 = vpack.c.bf16 %v235, %v234
    %v237 = vld [vmem:[#allocation8] sm:$0xff]
    %v238 = vld [vmem:[#allocation8 + $0x8] sm:$0xff]
    %v239 = vld [vmem:[#allocation8 + $0x10] sm:$0xff]
    %v240 = vld [vmem:[#allocation8 + $0x18] sm:$0xff]
    %v241 = vld [vmem:[#allocation8 + $0x20] sm:$0xff]
    %v242 = vld [vmem:[#allocation8 + $0x28] sm:$0xff]
    %v243 = vld [vmem:[#allocation8 + $0x30] sm:$0xff]
    %v244 = vld [vmem:[#allocation8 + $0x38] sm:$0xff]
    %v245 = vld [vmem:[#allocation8 + $0x40] sm:$0xff]
    %v246 = vld [vmem:[#allocation8 + $0x48] sm:$0xff]
    %v247 = vld [vmem:[#allocation8 + $0x50] sm:$0xff]
    %v248 = vld [vmem:[#allocation8 + $0x58] sm:$0xff]
    %v249 = vld [vmem:[#allocation8 + $0x60] sm:$0xff]
    %v250 = vld [vmem:[#allocation8 + $0x68] sm:$0xff]
    %v251 = vld [vmem:[#allocation8 + $0x70] sm:$0xff]
    %v252 = vld [vmem:[#allocation8 + $0x78] sm:$0xff]
    %v253 = vld [vmem:[#allocation8 + $0x80] sm:$0xff]
    %v254 = vld [vmem:[#allocation8 + $0x88] sm:$0xff]
    %v255 = vld [vmem:[#allocation8 + $0x90] sm:$0xff]
    %v256 = vld [vmem:[#allocation8 + $0x98] sm:$0xff]
    %v257 = vld [vmem:[#allocation8 + $0xa0] sm:$0xff]
    %v258 = vld [vmem:[#allocation8 + $0xa8] sm:$0xff]
    %v259 = vld [vmem:[#allocation8 + $0xb0] sm:$0xff]
    %v260 = vld [vmem:[#allocation8 + $0xb8] sm:$0xff]
    %v261 = vld [vmem:[#allocation8 + $0xc0] sm:$0xff]
    %v262 = vld [vmem:[#allocation8 + $0xc8] sm:$0xff]
    %v263 = vld [vmem:[#allocation8 + $0xd0] sm:$0xff]
    %v264 = vld [vmem:[#allocation8 + $0xd8] sm:$0xff]
    %v265 = vld [vmem:[#allocation8 + $0xe0] sm:$0xff]
    %v266 = vld [vmem:[#allocation8 + $0xe8] sm:$0xff]
    %v267 = vld [vmem:[#allocation8 + $0xf0] sm:$0xff]
    %v268 = vld [vmem:[#allocation8 + $0xf8] sm:$0xff]
    %v269 = vld [vmem:[#allocation8 + $0x100] sm:$0xff]
    %v270 = vld [vmem:[#allocation8 + $0x108] sm:$0xff]
    %v271 = vld [vmem:[#allocation8 + $0x110] sm:$0xff]
    %v272 = vld [vmem:[#allocation8 + $0x118] sm:$0xff]
    %v273 = vld [vmem:[#allocation8 + $0x120] sm:$0xff]
    %v274 = vld [vmem:[#allocation8 + $0x128] sm:$0xff]
    %v275 = vld [vmem:[#allocation8 + $0x130] sm:$0xff]
    %v276 = vld [vmem:[#allocation8 + $0x138] sm:$0xff]
    %v277 = vld [vmem:[#allocation8 + $0x140] sm:$0xff]
    %v278 = vld [vmem:[#allocation8 + $0x148] sm:$0xff]
    %v279 = vld [vmem:[#allocation8 + $0x150] sm:$0xff]
    %v280 = vld [vmem:[#allocation8 + $0x158] sm:$0xff]
    %v281 = vld [vmem:[#allocation8 + $0x160] sm:$0xff]
    %v282 = vld [vmem:[#allocation8 + $0x168] sm:$0xff]
    %v283 = vld [vmem:[#allocation8 + $0x170] sm:$0xff]
    %v284 = vld [vmem:[#allocation8 + $0x178] sm:$0xff]
    %v285 = vld [vmem:[#allocation10] sm:$0x3f]
    %v287 = vperm.slane %v285, 0
    %v288 = vperm.slane %v285, 1
    %v289 = vperm.slane %v285, 2
    %v290 = vperm.slane %v285, 3
    %v291 = vperm.slane %v285, 4
    %v292 = vperm.slane %v285, 5
    %v347 = vunpack.c.l.b16 %v237
    %v348 = vunpack.c.h.b16 %v237
    %v349 = vunpack.c.l.b16 %v238
    %v350 = vunpack.c.h.b16 %v238
    %v351 = vunpack.c.l.b16 %v239
    %v352 = vunpack.c.h.b16 %v239
    %v353 = vunpack.c.l.b16 %v240
    %v354 = vunpack.c.h.b16 %v240
    %v355 = vunpack.c.l.b16 %v241
    %v356 = vunpack.c.h.b16 %v241
    %v357 = vunpack.c.l.b16 %v242
    %v358 = vunpack.c.h.b16 %v242
    %v359 = vunpack.c.l.b16 %v243
    %v360 = vunpack.c.h.b16 %v243
    %v361 = vunpack.c.l.b16 %v244
    %v362 = vunpack.c.h.b16 %v244
    %v363 = vunpack.c.l.b16 %v245
    %v364 = vunpack.c.h.b16 %v245
    %v365 = vunpack.c.l.b16 %v246
    %v366 = vunpack.c.h.b16 %v246
    %v367 = vunpack.c.l.b16 %v247
    %v368 = vunpack.c.h.b16 %v247
    %v369 = vunpack.c.l.b16 %v248
    %v370 = vunpack.c.h.b16 %v248
    %v371 = vunpack.c.l.b16 %v249
    %v372 = vunpack.c.h.b16 %v249
    %v373 = vunpack.c.l.b16 %v250
    %v374 = vunpack.c.h.b16 %v250
    %v375 = vunpack.c.l.b16 %v251
    %v376 = vunpack.c.h.b16 %v251
    %v377 = vunpack.c.l.b16 %v252
    %v378 = vunpack.c.h.b16 %v252
    %v379 = vunpack.c.l.b16 %v253
    %v380 = vunpack.c.h.b16 %v253
    %v381 = vunpack.c.l.b16 %v254
    %v382 = vunpack.c.h.b16 %v254
    %v383 = vunpack.c.l.b16 %v255
    %v384 = vunpack.c.h.b16 %v255
    %v385 = vunpack.c.l.b16 %v256
    %v386 = vunpack.c.h.b16 %v256
    %v387 = vunpack.c.l.b16 %v257
    %v388 = vunpack.c.h.b16 %v257
    %v389 = vunpack.c.l.b16 %v258
    %v390 = vunpack.c.h.b16 %v258
    %v391 = vunpack.c.l.b16 %v259
    %v392 = vunpack.c.h.b16 %v259
    %v393 = vunpack.c.l.b16 %v260
    %v394 = vunpack.c.h.b16 %v260
    %v395 = vunpack.c.l.b16 %v261
    %v396 = vunpack.c.h.b16 %v261
    %v397 = vunpack.c.l.b16 %v262
    %v398 = vunpack.c.h.b16 %v262
    %v399 = vunpack.c.l.b16 %v263
    %v400 = vunpack.c.h.b16 %v263
    %v401 = vunpack.c.l.b16 %v264
    %v402 = vunpack.c.h.b16 %v264
    %v403 = vunpack.c.l.b16 %v265
    %v404 = vunpack.c.h.b16 %v265
    %v405 = vunpack.c.l.b16 %v266
    %v406 = vunpack.c.h.b16 %v266
    %v407 = vunpack.c.l.b16 %v267
    %v408 = vunpack.c.h.b16 %v267
    %v409 = vunpack.c.l.b16 %v268
    %v410 = vunpack.c.h.b16 %v268
    %v411 = vunpack.c.l.b16 %v269
    %v412 = vunpack.c.h.b16 %v269
    %v413 = vunpack.c.l.b16 %v270
    %v414 = vunpack.c.h.b16 %v270
    %v415 = vunpack.c.l.b16 %v271
    %v416 = vunpack.c.h.b16 %v271
    %v417 = vunpack.c.l.b16 %v272
    %v418 = vunpack.c.h.b16 %v272
    %v419 = vunpack.c.l.b16 %v273
    %v420 = vunpack.c.h.b16 %v273
    %v421 = vunpack.c.l.b16 %v274
    %v422 = vunpack.c.h.b16 %v274
    %v423 = vunpack.c.l.b16 %v275
    %v424 = vunpack.c.h.b16 %v275
    %v425 = vunpack.c.l.b16 %v276
    %v426 = vunpack.c.h.b16 %v276
    %v427 = vunpack.c.l.b16 %v277
    %v428 = vunpack.c.h.b16 %v277
    %v429 = vunpack.c.l.b16 %v278
    %v430 = vunpack.c.h.b16 %v278
    %v431 = vunpack.c.l.b16 %v279
    %v432 = vunpack.c.h.b16 %v279
    %v433 = vunpack.c.l.b16 %v280
    %v434 = vunpack.c.h.b16 %v280
    %v435 = vunpack.c.l.b16 %v281
    %v436 = vunpack.c.h.b16 %v281
    %v437 = vunpack.c.l.b16 %v282
    %v438 = vunpack.c.h.b16 %v282
    %v439 = vunpack.c.l.b16 %v283
    %v440 = vunpack.c.h.b16 %v283
    %v441 = vunpack.c.l.b16 %v284
    %v442 = vunpack.c.h.b16 %v284
    %v443 = vpack.c.b16 %v353, %v347
    %v444 = vpack.c.b16 %v354, %v348
    %v445 = vpack.c.b16 %v355, %v349
    %v446 = vpack.c.b16 %v356, %v350
    %v447 = vpack.c.b16 %v357, %v351
    %v448 = vpack.c.b16 %v358, %v352
    %v449 = vpack.c.b16 %v365, %v359
    %v450 = vpack.c.b16 %v366, %v360
    %v451 = vpack.c.b16 %v367, %v361
    %v452 = vpack.c.b16 %v368, %v362
    %v453 = vpack.c.b16 %v369, %v363
    %v454 = vpack.c.b16 %v370, %v364
    %v455 = vpack.c.b16 %v377, %v371
    %v456 = vpack.c.b16 %v378, %v372
    %v457 = vpack.c.b16 %v379, %v373
    %v458 = vpack.c.b16 %v380, %v374
    %v459 = vpack.c.b16 %v381, %v375
    %v460 = vpack.c.b16 %v382, %v376
    %v461 = vpack.c.b16 %v389, %v383
    %v462 = vpack.c.b16 %v390, %v384
    %v463 = vpack.c.b16 %v391, %v385
    %v464 = vpack.c.b16 %v392, %v386
    %v465 = vpack.c.b16 %v393, %v387
    %v466 = vpack.c.b16 %v394, %v388
    %v467 = vpack.c.b16 %v401, %v395
    %v468 = vpack.c.b16 %v402, %v396
    %v469 = vpack.c.b16 %v403, %v397
    %v470 = vpack.c.b16 %v404, %v398
    %v471 = vpack.c.b16 %v405, %v399
    %v472 = vpack.c.b16 %v406, %v400
    %v473 = vpack.c.b16 %v413, %v407
    %v474 = vpack.c.b16 %v414, %v408
    %v475 = vpack.c.b16 %v415, %v409
    %v476 = vpack.c.b16 %v416, %v410
    %v477 = vpack.c.b16 %v417, %v411
    %v478 = vpack.c.b16 %v418, %v412
    %v479 = vpack.c.b16 %v425, %v419
    %v480 = vpack.c.b16 %v426, %v420
    %v481 = vpack.c.b16 %v427, %v421
    %v482 = vpack.c.b16 %v428, %v422
    %v483 = vpack.c.b16 %v429, %v423
    %v484 = vpack.c.b16 %v430, %v424
    %v485 = vpack.c.b16 %v437, %v431
    %v486 = vpack.c.b16 %v438, %v432
    %v487 = vpack.c.b16 %v439, %v433
    %v488 = vpack.c.b16 %v440, %v434
    %v489 = vpack.c.b16 %v441, %v435
    %v490 = vpack.c.b16 %v442, %v436
    %539 = vmatpush.bf16.msra.mxu0 %v485
    %540 = vmatpush.bf16.msra.mxu0 %v479
    %541 = vmatpush.bf16.msra.mxu0 %v473
    %542 = vmatpush.bf16.msra.mxu0 %v467
    %543 = vmatpush.bf16.msra.mxu0 %v461
    %544 = vmatpush.bf16.msra.mxu0 %v455
    %545 = vmatpush.bf16.msra.mxu0 %v449
    %546 = vmatpush.bf16.msra.mxu0 %v443
    %547 = vmatmul.bf16.gmra.mxu0 %v236
    %v548 = vpop.f32.mrf.mxu0
    %v549 = vadd.f32 %v287, %v548
    %v550 = vpop.f32.mrf.mxu0
    %v551 = vadd.f32 %v287, %v550
    %552 = vdwg.mxu0
    %553 = vmatpush.bf16.msra.mxu0 %v486
    %554 = vmatpush.bf16.msra.mxu0 %v480
    %555 = vmatpush.bf16.msra.mxu0 %v474
    %556 = vmatpush.bf16.msra.mxu0 %v468
    %557 = vmatpush.bf16.msra.mxu0 %v462
    %558 = vmatpush.bf16.msra.mxu0 %v456
    %559 = vmatpush.bf16.msra.mxu0 %v450
    %560 = vmatpush.bf16.msra.mxu0 %v444
    %561 = vmatmul.bf16.gmra.mxu0 %v236
    %v562 = vpop.f32.mrf.mxu0
    %v563 = vadd.f32 %v288, %v562
    %v564 = vpop.f32.mrf.mxu0
    %v565 = vadd.f32 %v288, %v564
    %566 = vdwg.mxu0
    %567 = vmatpush.bf16.msra.mxu0 %v487
    %568 = vmatpush.bf16.msra.mxu0 %v481
    %569 = vmatpush.bf16.msra.mxu0 %v475
    %570 = vmatpush.bf16.msra.mxu0 %v469
    %571 = vmatpush.bf16.msra.mxu0 %v463
    %572 = vmatpush.bf16.msra.mxu0 %v457
    %573 = vmatpush.bf16.msra.mxu0 %v451
    %574 = vmatpush.bf16.msra.mxu0 %v445
    %575 = vmatmul.bf16.gmra.mxu0 %v236
    %v576 = vpop.f32.mrf.mxu0
    %v577 = vadd.f32 %v289, %v576
    %v578 = vpop.f32.mrf.mxu0
    %v579 = vadd.f32 %v289, %v578
    %580 = vdwg.mxu0
    %581 = vmatpush.bf16.msra.mxu0 %v488
    %582 = vmatpush.bf16.msra.mxu0 %v482
    %583 = vmatpush.bf16.msra.mxu0 %v476
    %584 = vmatpush.bf16.msra.mxu0 %v470
    %585 = vmatpush.bf16.msra.mxu0 %v464
    %586 = vmatpush.bf16.msra.mxu0 %v458
    %587 = vmatpush.bf16.msra.mxu0 %v452
    %588 = vmatpush.bf16.msra.mxu0 %v446
    %589 = vmatmul.bf16.gmra.mxu0 %v236
    %v590 = vpop.f32.mrf.mxu0
    %v591 = vadd.f32 %v290, %v590
    %v592 = vpop.f32.mrf.mxu0
    %v593 = vadd.f32 %v290, %v592
    %594 = vdwg.mxu0
    %595 = vmatpush.bf16.msra.mxu0 %v489
    %596 = vmatpush.bf16.msra.mxu0 %v483
    %597 = vmatpush.bf16.msra.mxu0 %v477
    %598 = vmatpush.bf16.msra.mxu0 %v471
    %599 = vmatpush.bf16.msra.mxu0 %v465
    %600 = vmatpush.bf16.msra.mxu0 %v459
    %601 = vmatpush.bf16.msra.mxu0 %v453
    %602 = vmatpush.bf16.msra.mxu0 %v447
    %603 = vmatmul.bf16.gmra.mxu0 %v236
    %v604 = vpop.f32.mrf.mxu0
    %v605 = vadd.f32 %v291, %v604
    %v606 = vpop.f32.mrf.mxu0
    %v607 = vadd.f32 %v291, %v606
    %608 = vdwg.mxu0
    %609 = vmatpush.bf16.msra.mxu0 %v490
    %610 = vmatpush.bf16.msra.mxu0 %v484
    %611 = vmatpush.bf16.msra.mxu0 %v478
    %612 = vmatpush.bf16.msra.mxu0 %v472
    %613 = vmatpush.bf16.msra.mxu0 %v466
    %614 = vmatpush.bf16.msra.mxu0 %v460
    %615 = vmatpush.bf16.msra.mxu0 %v454
    %616 = vmatpush.bf16.msra.mxu0 %v448
    %617 = vmatmul.bf16.gmra.mxu0 %v236
    %v618 = vpop.f32.mrf.mxu0
    %v619 = vadd.f32 %v292, %v618
    %v620 = vpop.f32.mrf.mxu0
    %v621 = vadd.f32 %v292, %v620
    %622 = vdwg.mxu0
    %v623 = vmul.f32 %v549, %v549
    %v624 = vmul.f32 %v551, %v551
    %v625 = vmul.f32 %v563, %v563
    %v626 = vmul.f32 %v565, %v565
    %v627 = vadd.f32 %v623, %v625
    %v628 = vadd.f32 %v624, %v626
    %v629 = vmul.f32 %v577, %v577
    %v630 = vmul.f32 %v579, %v579
    %v631 = vadd.f32 %v627, %v629
    %v632 = vadd.f32 %v628, %v630
    %v633 = vrsqrt.pop %v631
    %v634 = vmul.f32 %v633, %v631
    %v635 = vmul.f32 %v634, %v633
    %v636 = vmul.f32 0.5, %v635
    %v637 = vsub.f32 1.5, %v636
    %v638 = vmul.f32 %v633, %v637
    %v639 = vmul.f32 %v631, %v638
    %vm640 = vcmp.eq.f32.partialorder %v631, inf
    %v641 = vsel %vm640, %v631, %v639
    %vm642 = vcmp.eq.f32.partialorder %v631, 0.0
    %v643 = vand.u32 %v631, 2147483648
    %v644 = vsel %vm642, %v643, %v641
    %v645 = vrsqrt.pop %v632
    %v646 = vmul.f32 %v645, %v632
    %v647 = vmul.f32 %v646, %v645
    %v648 = vmul.f32 0.5, %v647
    %v649 = vsub.f32 1.5, %v648
    %v650 = vmul.f32 %v645, %v649
    %v651 = vmul.f32 %v632, %v650
    %vm652 = vcmp.eq.f32.partialorder %v632, inf
    %v653 = vsel %vm652, %v632, %v651
    %vm654 = vcmp.eq.f32.partialorder %v632, 0.0
    %v655 = vand.u32 %v632, 2147483648
    %v656 = vsel %vm654, %v655, %v653
    %v657 = vmax.f32 %v644, 1e-12
    %v658 = vmax.f32 %v656, 1e-12
    %v659 = vrcp.pop %v657
    %v660 = vmul.f32 %v657, %v659
    %v661 = vsub.f32 1.0, %v660
    %v662 = vmul.f32 %v659, %v661
    %v663 = vadd.f32 %v659, %v662
    %vm664 = vweird.f32 %v657
    %vm665 = vweird.f32 %v659
    %vm666 = vmor %vm664, %vm665
    %v667 = vsel %vm666, %v659, %v663
    %v668 = vand.u32 2147483647, %v657
    %vm669 = vcmp.eq.f32.partialorder %v668, 8.507059e+37
    %v670 = vand.u32 %v657, 2147483648
    %v671 = vor.u32 1.1754944e-38, %v670
    %v672 = vsel %vm669, %v671, %v667
    %v673 = vmul.f32 1.0, %v672
    %v674 = vrcp.pop %v658
    %v675 = vmul.f32 %v658, %v674
    %v676 = vsub.f32 1.0, %v675
    %v677 = vmul.f32 %v674, %v676
    %v678 = vadd.f32 %v674, %v677
    %vm679 = vweird.f32 %v658
    %vm680 = vweird.f32 %v674
    %vm681 = vmor %vm679, %vm680
    %v682 = vsel %vm681, %v674, %v678
    %v683 = vand.u32 2147483647, %v658
    %vm684 = vcmp.eq.f32.partialorder %v683, 8.507059e+37
    %v685 = vand.u32 %v658, 2147483648
    %v686 = vor.u32 1.1754944e-38, %v685
    %v687 = vsel %vm684, %v686, %v682
    %v688 = vmul.f32 1.0, %v687
    %v689 = vmul.f32 %v549, %v673
    %v690 = vmul.f32 %v551, %v688
    %v691 = vmul.f32 %v563, %v673
    %v692 = vmul.f32 %v565, %v688
    %v693 = vmul.f32 %v577, %v673
    %v694 = vmul.f32 %v579, %v688
    %v695 = vmul.f32 %v689, %v591
    %v696 = vmul.f32 %v690, %v593
    %v697 = vmul.f32 %v691, %v605
    %v698 = vmul.f32 %v692, %v607
    %v699 = vadd.f32 %v695, %v697
    %v700 = vadd.f32 %v696, %v698
    %v701 = vmul.f32 %v693, %v619
    %v702 = vmul.f32 %v694, %v621
    %v703 = vadd.f32 %v699, %v701
    %v704 = vadd.f32 %v700, %v702
    %v705 = vmul.f32 %v703, %v689
    %v706 = vmul.f32 %v704, %v690
    %v707 = vsub.f32 %v591, %v705
    %v708 = vsub.f32 %v593, %v706
    %v709 = vmul.f32 %v703, %v691
    %v710 = vmul.f32 %v704, %v692
    %v711 = vsub.f32 %v605, %v709
    %v712 = vsub.f32 %v607, %v710
    %v713 = vmul.f32 %v703, %v693
    %v714 = vmul.f32 %v704, %v694
    %v715 = vsub.f32 %v619, %v713
    %v716 = vsub.f32 %v621, %v714
    %v717 = vmul.f32 %v707, %v707
    %v718 = vmul.f32 %v708, %v708
    %v719 = vmul.f32 %v711, %v711
    %v720 = vmul.f32 %v712, %v712
    %v721 = vadd.f32 %v717, %v719
    %v722 = vadd.f32 %v718, %v720
    %v723 = vmul.f32 %v715, %v715
    %v724 = vmul.f32 %v716, %v716
    %v725 = vadd.f32 %v721, %v723
    %v726 = vadd.f32 %v722, %v724
    %v727 = vrsqrt.pop %v725
    %v728 = vmul.f32 %v727, %v725
    %v729 = vmul.f32 %v728, %v727
    %v730 = vmul.f32 0.5, %v729
    %v731 = vsub.f32 1.5, %v730
    %v732 = vmul.f32 %v727, %v731
    %v733 = vmul.f32 %v725, %v732
    %vm734 = vcmp.eq.f32.partialorder %v725, inf
    %v735 = vsel %vm734, %v725, %v733
    %vm736 = vcmp.eq.f32.partialorder %v725, 0.0
    %v737 = vand.u32 %v725, 2147483648
    %v738 = vsel %vm736, %v737, %v735
    %v739 = vrsqrt.pop %v726
    %v740 = vmul.f32 %v739, %v726
    %v741 = vmul.f32 %v740, %v739
    %v742 = vmul.f32 0.5, %v741
    %v743 = vsub.f32 1.5, %v742
    %v744 = vmul.f32 %v739, %v743
    %v745 = vmul.f32 %v726, %v744
    %vm746 = vcmp.eq.f32.partialorder %v726, inf
    %v747 = vsel %vm746, %v726, %v745
    %vm748 = vcmp.eq.f32.partialorder %v726, 0.0
    %v749 = vand.u32 %v726, 2147483648
    %v750 = vsel %vm748, %v749, %v747
    %v751 = vmax.f32 %v738, 1e-12
    %v752 = vmax.f32 %v750, 1e-12
    %v753 = vrcp.pop %v751
    %v754 = vmul.f32 %v751, %v753
    %v755 = vsub.f32 1.0, %v754
    %v756 = vmul.f32 %v753, %v755
    %v757 = vadd.f32 %v753, %v756
    %vm758 = vweird.f32 %v751
    %vm759 = vweird.f32 %v753
    %vm760 = vmor %vm758, %vm759
    %v761 = vsel %vm760, %v753, %v757
    %v762 = vand.u32 2147483647, %v751
    %vm763 = vcmp.eq.f32.partialorder %v762, 8.507059e+37
    %v764 = vand.u32 %v751, 2147483648
    %v765 = vor.u32 1.1754944e-38, %v764
    %v766 = vsel %vm763, %v765, %v761
    %v767 = vmul.f32 1.0, %v766
    %v768 = vrcp.pop %v752
    %v769 = vmul.f32 %v752, %v768
    %v770 = vsub.f32 1.0, %v769
    %v771 = vmul.f32 %v768, %v770
    %v772 = vadd.f32 %v768, %v771
    %vm773 = vweird.f32 %v752
    %vm774 = vweird.f32 %v768
    %vm775 = vmor %vm773, %vm774
    %v776 = vsel %vm775, %v768, %v772
    %v777 = vand.u32 2147483647, %v752
    %vm778 = vcmp.eq.f32.partialorder %v777, 8.507059e+37
    %v779 = vand.u32 %v752, 2147483648
    %v780 = vor.u32 1.1754944e-38, %v779
    %v781 = vsel %vm778, %v780, %v776
    %v782 = vmul.f32 1.0, %v781
    %v783 = vmul.f32 %v707, %v767
    %v784 = vmul.f32 %v708, %v782
    %v785 = vmul.f32 %v711, %v767
    %v786 = vmul.f32 %v712, %v782
    %v787 = vmul.f32 %v715, %v767
    %v788 = vmul.f32 %v716, %v782
    %v789 = vmul.f32 %v691, %v787
    %v790 = vmul.f32 %v692, %v788
    %v791 = vmul.f32 %v693, %v785
    %v792 = vmul.f32 %v694, %v786
    %v793 = vsub.f32 %v789, %v791
    %v794 = vsub.f32 %v790, %v792
    %v795 = vmul.f32 %v693, %v783
    %v796 = vmul.f32 %v694, %v784
    %v797 = vmul.f32 %v689, %v787
    %v798 = vmul.f32 %v690, %v788
    %v799 = vsub.f32 %v795, %v797
    %v800 = vsub.f32 %v796, %v798
    %v801 = vmul.f32 %v689, %v785
    %v802 = vmul.f32 %v690, %v786
    %v803 = vmul.f32 %v691, %v783
    %v804 = vmul.f32 %v692, %v784
    %v805 = vsub.f32 %v801, %v803
    %v806 = vsub.f32 %v802, %v804
    %807 = vst [vmem:[#allocation11] sm:$0xff] %v689
    %808 = vst [vmem:[#allocation11 + $0x48] sm:$0xff] %v690
    %809 = vst [vmem:[#allocation11 + $0x8] sm:$0xff] %v783
    %810 = vst [vmem:[#allocation11 + $0x50] sm:$0xff] %v784
    %811 = vst [vmem:[#allocation11 + $0x10] sm:$0xff] %v793
    %812 = vst [vmem:[#allocation11 + $0x58] sm:$0xff] %v794
    %813 = vst [vmem:[#allocation11 + $0x18] sm:$0xff] %v691
    %814 = vst [vmem:[#allocation11 + $0x60] sm:$0xff] %v692
    %815 = vst [vmem:[#allocation11 + $0x20] sm:$0xff] %v785
    %816 = vst [vmem:[#allocation11 + $0x68] sm:$0xff] %v786
    %817 = vst [vmem:[#allocation11 + $0x28] sm:$0xff] %v799
    %818 = vst [vmem:[#allocation11 + $0x70] sm:$0xff] %v800
    %819 = vst [vmem:[#allocation11 + $0x30] sm:$0xff] %v693
    %820 = vst [vmem:[#allocation11 + $0x78] sm:$0xff] %v694
    %821 = vst [vmem:[#allocation11 + $0x38] sm:$0xff] %v787
    %822 = vst [vmem:[#allocation11 + $0x80] sm:$0xff] %v788
    %823 = vst [vmem:[#allocation11 + $0x40] sm:$0xff] %v805
    %824 = vst [vmem:[#allocation11 + $0x88] sm:$0xff] %v806
    // Predicated region
    $region50: #{tpu_custom_call.1} parent=1 // pred_check
      _
    $region51: #{tpu_custom_call.1} parent=1 // pred_check_branch
      %826 = sbr.rel (0) target = $region53
    $region52: #{tpu_custom_call.1} parent=1 // pred_region
      %828 = vsyncadd [#allocation4], 0
      %s829 = sshll.u32 [#allocation11], 4
      %s830 = int_to_ptr.vmem [resolvable:$true] %s829
      %s831 = sshll.u32 %s7, 4
      %s832 = int_to_ptr.hbm [resolvable:$true] %s831
      %837 = dma.vmem_to_hbm [thread:$0]  %s830, 2304, %s832, [#allocation4], 1152, 1152, 72
    $region53: #{tpu_custom_call.1} parent=1 // pred_fallthru
      _
    // Predicated region
    $region54: #{tpu_custom_call.1} parent=1 // pred_check
      _
    $region55: #{tpu_custom_call.1} parent=1 // pred_check_branch
      %839 = sbr.rel (0) target = $region57
    $region56: #{tpu_custom_call.1} parent=1 // pred_region
      %841 = dma.done [#allocation4], 2304
    $region57: #{tpu_custom_call.1} parent=1 // pred_fallthru
      _
    %842 = vsyncpa [#allocation3], 1
    %843 = vsyncpa [#allocation6], 1
    %844 = vsyncpa [#allocation9], 1
    %845 = vsyncpa [#allocation4], 1

</llo_original>
